<compile_context>
chip_gen: v5e
topology: v5e:2x2
jax: 0.10.0
libtpu: 0.0.40
codegen_flags: <defaults>
</compile_context>

<pallas_src>
import math
import functools

import jax
import jax.numpy as jnp
from jax import lax
from jax.experimental import pallas as pl
from jax.experimental.pallas import tpu as pltpu


def _mha_kernel(q_ref, k_ref, v_ref,
                wq_ref, bq_ref, wk_ref, bk_ref, wv_ref, bv_ref,
                wo_ref, bo_ref,
                o_ref, ctx_ref, *, h, d_k, inv_sqrt_dk):
    cdt = wq_ref.dtype  # compute (MXU feed) dtype: bf16, pre-cast in the wrapper

    q = q_ref[...].astype(cdt)   # (S, D)
    k = k_ref[...].astype(cdt)
    v = v_ref[...].astype(cdt)

    # Full-width (S, D) @ (D, D) projections: full MXU contraction depth and
    # lane-dense outputs; f32 accumulation, f32 bias add.
    Qa = jnp.dot(q, wq_ref[...], preferred_element_type=jnp.float32) + bq_ref[...]
    Ka = jnp.dot(k, wk_ref[...], preferred_element_type=jnp.float32) + bk_ref[...]
    Va = jnp.dot(v, wv_ref[...], preferred_element_type=jnp.float32) + bv_ref[...]

    # Fold 1/sqrt(d_k) into Q (S*D multiplies instead of S*S per head on scores).
    Qa = (Qa * inv_sqrt_dk).astype(cdt)
    Ka = Ka.astype(cdt)
    Va = Va.astype(cdt)

    # Static unroll over heads (h is small); each head writes its (S, d_k)
    # context into its column slab of the (S, D) concat scratch.
    for hh in range(h):
        sl = slice(hh * d_k, (hh + 1) * d_k)
        Qh = Qa[:, sl]
        Kh = Ka[:, sl]
        Vh = Va[:, sl]

        # scores = Qh @ Kh^T without materializing the transpose: contract the
        # last dims of both operands.
        scores = lax.dot_general(
            Qh, Kh, dimension_numbers=(((1,), (1,)), ((), ())),
            preferred_element_type=jnp.float32)                    # (S, S) f32

        # Numerically-stable softmax; normalization is deferred to after the
        # e @ V matmul so it touches (S, d_k) instead of (S, S) elements.
        m = jnp.max(scores, axis=-1, keepdims=True)
        e = jnp.exp(scores - m)                                    # (S, S) f32
        row_sum = jnp.sum(e, axis=-1, keepdims=True)               # (S, 1) f32
        # (dropout on the attention probabilities: identity, eval mode)

        ctx_un = jnp.dot(e.astype(cdt), Vh,
                         preferred_element_type=jnp.float32)       # (S, d_k) f32
        ctx = ctx_un * pl.reciprocal(row_sum, approx=True)

        ctx_ref[:, sl] = ctx.astype(cdt)

    # Single D-deep output projection over all concatenated heads.
    out = jnp.dot(ctx_ref[...], wo_ref[...],
                  preferred_element_type=jnp.float32) + bo_ref[...]
    o_ref[...] = out.astype(o_ref.dtype)


def prepare_params(params, compute_dtype=jnp.bfloat16):
    """Cast weight matrices to the MXU feed dtype (do once at init time).

    Biases stay f32 (they are added to the f32 accumulations).
    """
    out = dict(params)
    for n in ("wq", "wk", "wv", "wo"):
        out[n] = params[n].astype(compute_dtype)
    return out


def multi_headed_attention(query, key, value, params, *, h,
                           compute_dtype=jnp.bfloat16):
    """params = dict with wq,bq,wk,bk,wv,bv,wo,bo (W as (d_in, d_out)).

    Returns (B, S, D); same semantics as the PyTorch module's forward with
    mask=None and eval-mode dropout.
    """
    B, S, D = query.shape
    assert D % h == 0
    d_k = D // h

    # No head-splitting of the weights is needed anymore; only a dtype cast
    # (no-op if the caller already ran prepare_params once).
    p = prepare_params(params, compute_dtype)
    wq, wk, wv, wo = p["wq"], p["wk"], p["wv"], p["wo"]
    bq, bk, bv, bo = p["bq"], p["bk"], p["bv"], p["bo"]

    kernel = functools.partial(_mha_kernel, h=h, d_k=d_k,
                               inv_sqrt_dk=1.0 / math.sqrt(d_k))

    # Batch dim squeezed out of the kernel refs; weight/bias blocks are constant
    # across the grid, so they are DMA'd once and kept resident.
    seq_spec = pl.BlockSpec((None, S, D), lambda b: (b, 0, 0))
    w_spec = pl.BlockSpec((D, D), lambda b: (0, 0))
    b_spec = pl.BlockSpec((1, D), lambda b: (0, 0))

    # Explicit scoped-VMEM budget (v5e default is 16 MiB); generous but capped.
    in_bytes = jnp.dtype(query.dtype).itemsize
    c_bytes = jnp.dtype(compute_dtype).itemsize
    est = (3 * S * D * in_bytes * 2          # q/k/v double buffers
           + S * D * in_bytes * 2            # output double buffer
           + 4 * D * D * c_bytes * 2         # weight double buffers
           + 4 * D * 4 * 2                   # bias double buffers
           + S * D * c_bytes                 # ctx concat scratch
           + (3 * S * D + 2 * S * S) * 4)    # Qa/Ka/Va + scores/e temporaries
    vmem_limit = int(min(max(4 * est, 8 * 2**20), 64 * 2**20))

    return pl.pallas_call(
        kernel,
        out_shape=jax.ShapeDtypeStruct((B, S, D), query.dtype),
        grid_spec=pltpu.PrefetchScalarGridSpec(
            num_scalar_prefetch=0,
            grid=(B,),
            in_specs=[seq_spec, seq_spec, seq_spec,
                      w_spec, b_spec,    # Wq, bq
                      w_spec, b_spec,    # Wk, bk
                      w_spec, b_spec,    # Wv, bv
                      w_spec, b_spec],   # Wo, bo
            out_specs=seq_spec,
            scratch_shapes=[pltpu.VMEM((S, D), compute_dtype)],
        ),
        compiler_params=pltpu.CompilerParams(
            dimension_semantics=("parallel",),
            vmem_limit_bytes=vmem_limit),
    )(query, key, value, wq, bq, wk, bk, wv, bv, wo, bo)


def _reference(query, key, value, params, *, h):
    """Pure-JAX f32 reference mirroring the PyTorch forward (eval-mode dropout)."""
    B, S, D = query.shape
    d_k = D // h

    def lin(x, w, b):
        return x @ w + b

    def split(x):  # (B, S, D) -> (B, h, S, d_k)
        return x.reshape(B, S, h, d_k).transpose(0, 2, 1, 3)

    Q = split(lin(query, params["wq"], params["bq"]))
    K = split(lin(key, params["wk"], params["bk"]))
    V = split(lin(value, params["wv"], params["bv"]))

    scores = jnp.einsum("bhqd,bhkd->bhqk", Q, K) / math.sqrt(d_k)
    p = jax.nn.softmax(scores, axis=-1)
    x = jnp.einsum("bhqk,bhkd->bhqd", p, V)
    x = x.transpose(0, 2, 1, 3).reshape(B, S, D)
    return lin(x, params["wo"], params["bo"])


def _init_linear(key, d_in, d_out):
    # nn.Linear default init: U(-1/sqrt(fan_in), 1/sqrt(fan_in)) for W and b.
    kw, kb = jax.random.split(key)
    bound = 1.0 / math.sqrt(d_in)
    w = jax.random.uniform(kw, (d_in, d_out), jnp.float32, -bound, bound)
    b = jax.random.uniform(kb, (1, d_out), jnp.float32, -bound, bound)
    return w, b


if __name__ == "__main__":
    B, S, D, H = 2, 8, 32, 4   # batch, seq, d_model, heads  (d_k = 8)

    root = jax.random.PRNGKey(0)
    keys = jax.random.split(root, 8)

    wq, bq = _init_linear(keys[0], D, D)
    wk, bk = _init_linear(keys[1], D, D)
    wv, bv = _init_linear(keys[2], D, D)
    wo, bo = _init_linear(keys[3], D, D)
    params = dict(wq=wq, bq=bq, wk=wk, bk=bk, wv=wv, bv=bv, wo=wo, bo=bo)

    query = jax.random.normal(keys[4], (B, S, D), jnp.float32)
    key_ = jax.random.normal(keys[5], (B, S, D), jnp.float32)
    value = jax.random.normal(keys[6], (B, S, D), jnp.float32)

    out = multi_headed_attention(query, key_, value, params, h=H)
    out = jax.block_until_ready(out)

    ref = _reference(query, key_, value, params, h=H)
    assert out.shape == (B, S, D)
    # Tolerance accounts for bf16 MXU feeds (with f32 accumulation) and the EUP
    # approximate-reciprocal softmax normalization; f32 reference above.
    assert jnp.allclose(out, ref, atol=2e-2, rtol=2e-2), "mismatch vs reference"

    print("KERNEL_OK")
</pallas_src>

<mosaic_0001>
module attributes {stable_mosaic.version = 11 : i64} {
  func.func @_mha_kernel(%arg0: i32, %arg1: memref<1x8x32xf32, #tpu.memory_space<vmem>>, %arg2: memref<1x8x32xf32, #tpu.memory_space<vmem>>, %arg3: memref<1x8x32xf32, #tpu.memory_space<vmem>>, %arg4: memref<32x32xbf16, #tpu.memory_space<vmem>>, %arg5: memref<1x32xf32, #tpu.memory_space<vmem>>, %arg6: memref<32x32xbf16, #tpu.memory_space<vmem>>, %arg7: memref<1x32xf32, #tpu.memory_space<vmem>>, %arg8: memref<32x32xbf16, #tpu.memory_space<vmem>>, %arg9: memref<1x32xf32, #tpu.memory_space<vmem>>, %arg10: memref<32x32xbf16, #tpu.memory_space<vmem>>, %arg11: memref<1x32xf32, #tpu.memory_space<vmem>>, %arg12: memref<1x8x32xf32, #tpu.memory_space<vmem>>, %arg13: memref<8x32xbf16, #tpu.memory_space<vmem>>) attributes {dimension_semantics = [#tpu.dimension_semantics<parallel>], iteration_bounds = array<i64: 2>, scalar_prefetch = 0 : i64, scratch_operands = 1 : i64, tpu.core_type = #tpu.core_type<tc>, window_params = [{transform_indices = @transform_0, window_bounds = array<i64: 1, 8, 32>}, {transform_indices = @transform_1, window_bounds = array<i64: 1, 8, 32>}, {transform_indices = @transform_2, window_bounds = array<i64: 1, 8, 32>}, {pipeline_mode = #tpu.pipeline_mode<synchronous>, transform_indices = @transform_3, window_bounds = array<i64: 32, 32>}, {pipeline_mode = #tpu.pipeline_mode<synchronous>, transform_indices = @transform_4, window_bounds = array<i64: 1, 32>}, {pipeline_mode = #tpu.pipeline_mode<synchronous>, transform_indices = @transform_5, window_bounds = array<i64: 32, 32>}, {pipeline_mode = #tpu.pipeline_mode<synchronous>, transform_indices = @transform_6, window_bounds = array<i64: 1, 32>}, {pipeline_mode = #tpu.pipeline_mode<synchronous>, transform_indices = @transform_7, window_bounds = array<i64: 32, 32>}, {pipeline_mode = #tpu.pipeline_mode<synchronous>, transform_indices = @transform_8, window_bounds = array<i64: 1, 32>}, {pipeline_mode = #tpu.pipeline_mode<synchronous>, transform_indices = @transform_9, window_bounds = array<i64: 32, 32>}, {pipeline_mode = #tpu.pipeline_mode<synchronous>, transform_indices = @transform_10, window_bounds = array<i64: 1, 32>}, {transform_indices = @transform_11, window_bounds = array<i64: 1, 8, 32>}]} {
    %c0 = arith.constant 0 : index
    %c0_0 = arith.constant 0 : index
    %c0_1 = arith.constant 0 : index
    %0 = vector.load %arg1[%c0, %c0_0, %c0_1] : memref<1x8x32xf32, #tpu.memory_space<vmem>>, vector<1x8x32xf32>
    %1 = vector.shape_cast %0 : vector<1x8x32xf32> to vector<8x32xf32>
    %2 = arith.truncf %1 : vector<8x32xf32> to vector<8x32xbf16>
    %c0_2 = arith.constant 0 : index
    %c0_3 = arith.constant 0 : index
    %c0_4 = arith.constant 0 : index
    %3 = vector.load %arg2[%c0_2, %c0_3, %c0_4] : memref<1x8x32xf32, #tpu.memory_space<vmem>>, vector<1x8x32xf32>
    %4 = vector.shape_cast %3 : vector<1x8x32xf32> to vector<8x32xf32>
    %5 = arith.truncf %4 : vector<8x32xf32> to vector<8x32xbf16>
    %c0_5 = arith.constant 0 : index
    %c0_6 = arith.constant 0 : index
    %c0_7 = arith.constant 0 : index
    %6 = vector.load %arg3[%c0_5, %c0_6, %c0_7] : memref<1x8x32xf32, #tpu.memory_space<vmem>>, vector<1x8x32xf32>
    %7 = vector.shape_cast %6 : vector<1x8x32xf32> to vector<8x32xf32>
    %8 = arith.truncf %7 : vector<8x32xf32> to vector<8x32xbf16>
    %c0_8 = arith.constant 0 : index
    %c0_9 = arith.constant 0 : index
    %9 = vector.load %arg4[%c0_8, %c0_9] : memref<32x32xbf16, #tpu.memory_space<vmem>>, vector<32x32xbf16>
    %cst = arith.constant dense<0.000000e+00> : vector<8x32xf32>
    %10 = tpu.matmul %2, %9, %cst {dimension_numbers = #tpu.dot_dimension_numbers<[1], [0], [0], [1], [0, 0, 1, 1], [], []>} : vector<8x32xbf16>, vector<32x32xbf16>, vector<8x32xf32> -> vector<8x32xf32>
    %c0_10 = arith.constant 0 : index
    %c0_11 = arith.constant 0 : index
    %11 = vector.load %arg5[%c0_10, %c0_11] : memref<1x32xf32, #tpu.memory_space<vmem>>, vector<1x32xf32>
    %12 = vector.broadcast %11 : vector<1x32xf32> to vector<8x32xf32>
    %13 = arith.addf %10, %12 : vector<8x32xf32>
    %c0_12 = arith.constant 0 : index
    %c0_13 = arith.constant 0 : index
    %14 = vector.load %arg6[%c0_12, %c0_13] : memref<32x32xbf16, #tpu.memory_space<vmem>>, vector<32x32xbf16>
    %cst_14 = arith.constant dense<0.000000e+00> : vector<8x32xf32>
    %15 = tpu.matmul %5, %14, %cst_14 {dimension_numbers = #tpu.dot_dimension_numbers<[1], [0], [0], [1], [0, 0, 1, 1], [], []>} : vector<8x32xbf16>, vector<32x32xbf16>, vector<8x32xf32> -> vector<8x32xf32>
    %c0_15 = arith.constant 0 : index
    %c0_16 = arith.constant 0 : index
    %16 = vector.load %arg7[%c0_15, %c0_16] : memref<1x32xf32, #tpu.memory_space<vmem>>, vector<1x32xf32>
    %17 = vector.broadcast %16 : vector<1x32xf32> to vector<8x32xf32>
    %18 = arith.addf %15, %17 : vector<8x32xf32>
    %c0_17 = arith.constant 0 : index
    %c0_18 = arith.constant 0 : index
    %19 = vector.load %arg8[%c0_17, %c0_18] : memref<32x32xbf16, #tpu.memory_space<vmem>>, vector<32x32xbf16>
    %cst_19 = arith.constant dense<0.000000e+00> : vector<8x32xf32>
    %20 = tpu.matmul %8, %19, %cst_19 {dimension_numbers = #tpu.dot_dimension_numbers<[1], [0], [0], [1], [0, 0, 1, 1], [], []>} : vector<8x32xbf16>, vector<32x32xbf16>, vector<8x32xf32> -> vector<8x32xf32>
    %c0_20 = arith.constant 0 : index
    %c0_21 = arith.constant 0 : index
    %21 = vector.load %arg9[%c0_20, %c0_21] : memref<1x32xf32, #tpu.memory_space<vmem>>, vector<1x32xf32>
    %22 = vector.broadcast %21 : vector<1x32xf32> to vector<8x32xf32>
    %23 = arith.addf %20, %22 : vector<8x32xf32>
    %cst_22 = arith.constant 0.353553385 : f32
    %24 = vector.broadcast %cst_22 : f32 to vector<8x32xf32>
    %25 = arith.mulf %13, %24 : vector<8x32xf32>
    %26 = arith.truncf %25 : vector<8x32xf32> to vector<8x32xbf16>
    %27 = arith.truncf %18 : vector<8x32xf32> to vector<8x32xbf16>
    %28 = arith.truncf %23 : vector<8x32xf32> to vector<8x32xbf16>
    %29 = vector.extract_strided_slice %26 {offsets = [0, 0], sizes = [8, 8], strides = [1, 1]} : vector<8x32xbf16> to vector<8x8xbf16>
    %30 = vector.extract_strided_slice %27 {offsets = [0, 0], sizes = [8, 8], strides = [1, 1]} : vector<8x32xbf16> to vector<8x8xbf16>
    %31 = vector.extract_strided_slice %28 {offsets = [0, 0], sizes = [8, 8], strides = [1, 1]} : vector<8x32xbf16> to vector<8x8xbf16>
    %cst_23 = arith.constant dense<0.000000e+00> : vector<8x8xf32>
    %32 = tpu.matmul %29, %30, %cst_23 {dimension_numbers = #tpu.dot_dimension_numbers<[1], [1], [0], [0], [0, 0, 1, 0], [], []>} : vector<8x8xbf16>, vector<8x8xbf16>, vector<8x8xf32> -> vector<8x8xf32>
    %cst_24 = arith.constant dense<0xFF800000> : vector<8xf32>
    %33 = vector.multi_reduction <maximumf>, %32, %cst_24 [1] : vector<8x8xf32> to vector<8xf32>
    %34 = vector.shape_cast %33 : vector<8xf32> to vector<8x1xf32>
    %35 = vector.broadcast %34 : vector<8x1xf32> to vector<8x8xf32>
    %36 = arith.subf %32, %35 : vector<8x8xf32>
    %37 = math.exp %36 : vector<8x8xf32>
    %cst_25 = arith.constant dense<0.000000e+00> : vector<8xf32>
    %38 = vector.multi_reduction <add>, %37, %cst_25 [1] : vector<8x8xf32> to vector<8xf32>
    %39 = vector.shape_cast %38 : vector<8xf32> to vector<8x1xf32>
    %40 = arith.truncf %37 : vector<8x8xf32> to vector<8x8xbf16>
    %cst_26 = arith.constant dense<0.000000e+00> : vector<8x8xf32>
    %41 = tpu.matmul %40, %31, %cst_26 {dimension_numbers = #tpu.dot_dimension_numbers<[1], [0], [0], [1], [0, 0, 1, 1], [], []>} : vector<8x8xbf16>, vector<8x8xbf16>, vector<8x8xf32> -> vector<8x8xf32>
    %42 = tpu.reciprocal %39 {approx = true} : vector<8x1xf32> -> vector<8x1xf32>
    %43 = vector.broadcast %42 : vector<8x1xf32> to vector<8x8xf32>
    %44 = arith.mulf %41, %43 : vector<8x8xf32>
    %45 = arith.truncf %44 : vector<8x8xf32> to vector<8x8xbf16>
    %c0_27 = arith.constant 0 : index
    %c0_28 = arith.constant 0 : index
    %46 = vector.load %arg13[%c0_27, %c0_28] : memref<8x32xbf16, #tpu.memory_space<vmem>>, vector<8x8xbf16>
    tpu.vector_store %arg13[%c0_27, %c0_28], %45 {strides = array<i32>} : memref<8x32xbf16, #tpu.memory_space<vmem>>, vector<8x8xbf16>,
    %47 = vector.extract_strided_slice %26 {offsets = [0, 8], sizes = [8, 8], strides = [1, 1]} : vector<8x32xbf16> to vector<8x8xbf16>
    %48 = vector.extract_strided_slice %27 {offsets = [0, 8], sizes = [8, 8], strides = [1, 1]} : vector<8x32xbf16> to vector<8x8xbf16>
    %49 = vector.extract_strided_slice %28 {offsets = [0, 8], sizes = [8, 8], strides = [1, 1]} : vector<8x32xbf16> to vector<8x8xbf16>
    %cst_29 = arith.constant dense<0.000000e+00> : vector<8x8xf32>
    %50 = tpu.matmul %47, %48, %cst_29 {dimension_numbers = #tpu.dot_dimension_numbers<[1], [1], [0], [0], [0, 0, 1, 0], [], []>} : vector<8x8xbf16>, vector<8x8xbf16>, vector<8x8xf32> -> vector<8x8xf32>
    %cst_30 = arith.constant dense<0xFF800000> : vector<8xf32>
    %51 = vector.multi_reduction <maximumf>, %50, %cst_30 [1] : vector<8x8xf32> to vector<8xf32>
    %52 = vector.shape_cast %51 : vector<8xf32> to vector<8x1xf32>
    %53 = vector.broadcast %52 : vector<8x1xf32> to vector<8x8xf32>
    %54 = arith.subf %50, %53 : vector<8x8xf32>
    %55 = math.exp %54 : vector<8x8xf32>
    %cst_31 = arith.constant dense<0.000000e+00> : vector<8xf32>
    %56 = vector.multi_reduction <add>, %55, %cst_31 [1] : vector<8x8xf32> to vector<8xf32>
    %57 = vector.shape_cast %56 : vector<8xf32> to vector<8x1xf32>
    %58 = arith.truncf %55 : vector<8x8xf32> to vector<8x8xbf16>
    %cst_32 = arith.constant dense<0.000000e+00> : vector<8x8xf32>
    %59 = tpu.matmul %58, %49, %cst_32 {dimension_numbers = #tpu.dot_dimension_numbers<[1], [0], [0], [1], [0, 0, 1, 1], [], []>} : vector<8x8xbf16>, vector<8x8xbf16>, vector<8x8xf32> -> vector<8x8xf32>
    %60 = tpu.reciprocal %57 {approx = true} : vector<8x1xf32> -> vector<8x1xf32>
    %61 = vector.broadcast %60 : vector<8x1xf32> to vector<8x8xf32>
    %62 = arith.mulf %59, %61 : vector<8x8xf32>
    %63 = arith.truncf %62 : vector<8x8xf32> to vector<8x8xbf16>
    %c0_33 = arith.constant 0 : index
    %c8 = arith.constant 8 : index
    %64 = vector.load %arg13[%c0_33, %c8] : memref<8x32xbf16, #tpu.memory_space<vmem>>, vector<8x8xbf16>
    tpu.vector_store %arg13[%c0_33, %c8], %63 {strides = array<i32>} : memref<8x32xbf16, #tpu.memory_space<vmem>>, vector<8x8xbf16>,
    %65 = vector.extract_strided_slice %26 {offsets = [0, 16], sizes = [8, 8], strides = [1, 1]} : vector<8x32xbf16> to vector<8x8xbf16>
    %66 = vector.extract_strided_slice %27 {offsets = [0, 16], sizes = [8, 8], strides = [1, 1]} : vector<8x32xbf16> to vector<8x8xbf16>
    %67 = vector.extract_strided_slice %28 {offsets = [0, 16], sizes = [8, 8], strides = [1, 1]} : vector<8x32xbf16> to vector<8x8xbf16>
    %cst_34 = arith.constant dense<0.000000e+00> : vector<8x8xf32>
    %68 = tpu.matmul %65, %66, %cst_34 {dimension_numbers = #tpu.dot_dimension_numbers<[1], [1], [0], [0], [0, 0, 1, 0], [], []>} : vector<8x8xbf16>, vector<8x8xbf16>, vector<8x8xf32> -> vector<8x8xf32>
    %cst_35 = arith.constant dense<0xFF800000> : vector<8xf32>
    %69 = vector.multi_reduction <maximumf>, %68, %cst_35 [1] : vector<8x8xf32> to vector<8xf32>
    %70 = vector.shape_cast %69 : vector<8xf32> to vector<8x1xf32>
    %71 = vector.broadcast %70 : vector<8x1xf32> to vector<8x8xf32>
    %72 = arith.subf %68, %71 : vector<8x8xf32>
    %73 = math.exp %72 : vector<8x8xf32>
    %cst_36 = arith.constant dense<0.000000e+00> : vector<8xf32>
    %74 = vector.multi_reduction <add>, %73, %cst_36 [1] : vector<8x8xf32> to vector<8xf32>
    %75 = vector.shape_cast %74 : vector<8xf32> to vector<8x1xf32>
    %76 = arith.truncf %73 : vector<8x8xf32> to vector<8x8xbf16>
    %cst_37 = arith.constant dense<0.000000e+00> : vector<8x8xf32>
    %77 = tpu.matmul %76, %67, %cst_37 {dimension_numbers = #tpu.dot_dimension_numbers<[1], [0], [0], [1], [0, 0, 1, 1], [], []>} : vector<8x8xbf16>, vector<8x8xbf16>, vector<8x8xf32> -> vector<8x8xf32>
    %78 = tpu.reciprocal %75 {approx = true} : vector<8x1xf32> -> vector<8x1xf32>
    %79 = vector.broadcast %78 : vector<8x1xf32> to vector<8x8xf32>
    %80 = arith.mulf %77, %79 : vector<8x8xf32>
    %81 = arith.truncf %80 : vector<8x8xf32> to vector<8x8xbf16>
    %c0_38 = arith.constant 0 : index
    %c16 = arith.constant 16 : index
    %82 = vector.load %arg13[%c0_38, %c16] : memref<8x32xbf16, #tpu.memory_space<vmem>>, vector<8x8xbf16>
    tpu.vector_store %arg13[%c0_38, %c16], %81 {strides = array<i32>} : memref<8x32xbf16, #tpu.memory_space<vmem>>, vector<8x8xbf16>,
    %83 = vector.extract_strided_slice %26 {offsets = [0, 24], sizes = [8, 8], strides = [1, 1]} : vector<8x32xbf16> to vector<8x8xbf16>
    %84 = vector.extract_strided_slice %27 {offsets = [0, 24], sizes = [8, 8], strides = [1, 1]} : vector<8x32xbf16> to vector<8x8xbf16>
    %85 = vector.extract_strided_slice %28 {offsets = [0, 24], sizes = [8, 8], strides = [1, 1]} : vector<8x32xbf16> to vector<8x8xbf16>
    %cst_39 = arith.constant dense<0.000000e+00> : vector<8x8xf32>
    %86 = tpu.matmul %83, %84, %cst_39 {dimension_numbers = #tpu.dot_dimension_numbers<[1], [1], [0], [0], [0, 0, 1, 0], [], []>} : vector<8x8xbf16>, vector<8x8xbf16>, vector<8x8xf32> -> vector<8x8xf32>
    %cst_40 = arith.constant dense<0xFF800000> : vector<8xf32>
    %87 = vector.multi_reduction <maximumf>, %86, %cst_40 [1] : vector<8x8xf32> to vector<8xf32>
    %88 = vector.shape_cast %87 : vector<8xf32> to vector<8x1xf32>
    %89 = vector.broadcast %88 : vector<8x1xf32> to vector<8x8xf32>
    %90 = arith.subf %86, %89 : vector<8x8xf32>
    %91 = math.exp %90 : vector<8x8xf32>
    %cst_41 = arith.constant dense<0.000000e+00> : vector<8xf32>
    %92 = vector.multi_reduction <add>, %91, %cst_41 [1] : vector<8x8xf32> to vector<8xf32>
    %93 = vector.shape_cast %92 : vector<8xf32> to vector<8x1xf32>
    %94 = arith.truncf %91 : vector<8x8xf32> to vector<8x8xbf16>
    %cst_42 = arith.constant dense<0.000000e+00> : vector<8x8xf32>
    %95 = tpu.matmul %94, %85, %cst_42 {dimension_numbers = #tpu.dot_dimension_numbers<[1], [0], [0], [1], [0, 0, 1, 1], [], []>} : vector<8x8xbf16>, vector<8x8xbf16>, vector<8x8xf32> -> vector<8x8xf32>
    %96 = tpu.reciprocal %93 {approx = true} : vector<8x1xf32> -> vector<8x1xf32>
    %97 = vector.broadcast %96 : vector<8x1xf32> to vector<8x8xf32>
    %98 = arith.mulf %95, %97 : vector<8x8xf32>
    %99 = arith.truncf %98 : vector<8x8xf32> to vector<8x8xbf16>
    %c0_43 = arith.constant 0 : index
    %c24 = arith.constant 24 : index
    %100 = vector.load %arg13[%c0_43, %c24] : memref<8x32xbf16, #tpu.memory_space<vmem>>, vector<8x8xbf16>
    tpu.vector_store %arg13[%c0_43, %c24], %99 {strides = array<i32>} : memref<8x32xbf16, #tpu.memory_space<vmem>>, vector<8x8xbf16>,
    %c0_44 = arith.constant 0 : index
    %c0_45 = arith.constant 0 : index
    %101 = vector.load %arg13[%c0_44, %c0_45] : memref<8x32xbf16, #tpu.memory_space<vmem>>, vector<8x32xbf16>
    %c0_46 = arith.constant 0 : index
    %c0_47 = arith.constant 0 : index
    %102 = vector.load %arg10[%c0_46, %c0_47] : memref<32x32xbf16, #tpu.memory_space<vmem>>, vector<32x32xbf16>
    %cst_48 = arith.constant dense<0.000000e+00> : vector<8x32xf32>
    %103 = tpu.matmul %101, %102, %cst_48 {dimension_numbers = #tpu.dot_dimension_numbers<[1], [0], [0], [1], [0, 0, 1, 1], [], []>} : vector<8x32xbf16>, vector<32x32xbf16>, vector<8x32xf32> -> vector<8x32xf32>
    %c0_49 = arith.constant 0 : index
    %c0_50 = arith.constant 0 : index
    %104 = vector.load %arg11[%c0_49, %c0_50] : memref<1x32xf32, #tpu.memory_space<vmem>>, vector<1x32xf32>
    %105 = vector.broadcast %104 : vector<1x32xf32> to vector<8x32xf32>
    %106 = arith.addf %103, %105 : vector<8x32xf32>
    %c0_51 = arith.constant 0 : index
    %c0_52 = arith.constant 0 : index
    %c0_53 = arith.constant 0 : index
    %107 = vector.load %arg12[%c0_51, %c0_52, %c0_53] : memref<1x8x32xf32, #tpu.memory_space<vmem>>, vector<1x8x32xf32>
    %108 = vector.shape_cast %107 : vector<1x8x32xf32> to vector<8x32xf32>
    %109 = vector.shape_cast %106 : vector<8x32xf32> to vector<1x8x32xf32>
    tpu.vector_store %arg12[%c0_51, %c0_52, %c0_53], %109 {strides = array<i32>} : memref<1x8x32xf32, #tpu.memory_space<vmem>>, vector<1x8x32xf32>,
    return
  }
  func.func @transform_0(%arg0: i32) -> (i32, i32, i32) {
    %c0_i32 = arith.constant 0 : i32
    %c0_i32_0 = arith.constant 0 : i32
    %c0_i32_1 = arith.constant 0 : i32
    return %arg0, %c0_i32, %c0_i32_0 : i32, i32, i32
  }
  func.func @transform_1(%arg0: i32) -> (i32, i32, i32) {
    %c0_i32 = arith.constant 0 : i32
    %c0_i32_0 = arith.constant 0 : i32
    %c0_i32_1 = arith.constant 0 : i32
    return %arg0, %c0_i32, %c0_i32_0 : i32, i32, i32
  }
  func.func @transform_2(%arg0: i32) -> (i32, i32, i32) {
    %c0_i32 = arith.constant 0 : i32
    %c0_i32_0 = arith.constant 0 : i32
    %c0_i32_1 = arith.constant 0 : i32
    return %arg0, %c0_i32, %c0_i32_0 : i32, i32, i32
  }
  func.func @transform_3(%arg0: i32) -> (i32, i32) {
    %c0_i32 = arith.constant 0 : i32
    %c0_i32_0 = arith.constant 0 : i32
    %c0_i32_1 = arith.constant 0 : i32
    return %c0_i32, %c0_i32_0 : i32, i32
  }
  func.func @transform_4(%arg0: i32) -> (i32, i32) {
    %c0_i32 = arith.constant 0 : i32
    %c0_i32_0 = arith.constant 0 : i32
    %c0_i32_1 = arith.constant 0 : i32
    return %c0_i32, %c0_i32_0 : i32, i32
  }
  func.func @transform_5(%arg0: i32) -> (i32, i32) {
    %c0_i32 = arith.constant 0 : i32
    %c0_i32_0 = arith.constant 0 : i32
    %c0_i32_1 = arith.constant 0 : i32
    return %c0_i32, %c0_i32_0 : i32, i32
  }
  func.func @transform_6(%arg0: i32) -> (i32, i32) {
    %c0_i32 = arith.constant 0 : i32
    %c0_i32_0 = arith.constant 0 : i32
    %c0_i32_1 = arith.constant 0 : i32
    return %c0_i32, %c0_i32_0 : i32, i32
  }
  func.func @transform_7(%arg0: i32) -> (i32, i32) {
    %c0_i32 = arith.constant 0 : i32
    %c0_i32_0 = arith.constant 0 : i32
    %c0_i32_1 = arith.constant 0 : i32
    return %c0_i32, %c0_i32_0 : i32, i32
  }
  func.func @transform_8(%arg0: i32) -> (i32, i32) {
    %c0_i32 = arith.constant 0 : i32
    %c0_i32_0 = arith.constant 0 : i32
    %c0_i32_1 = arith.constant 0 : i32
    return %c0_i32, %c0_i32_0 : i32, i32
  }
  func.func @transform_9(%arg0: i32) -> (i32, i32) {
    %c0_i32 = arith.constant 0 : i32
    %c0_i32_0 = arith.constant 0 : i32
    %c0_i32_1 = arith.constant 0 : i32
    return %c0_i32, %c0_i32_0 : i32, i32
  }
  func.func @transform_10(%arg0: i32) -> (i32, i32) {
    %c0_i32 = arith.constant 0 : i32
    %c0_i32_0 = arith.constant 0 : i32
    %c0_i32_1 = arith.constant 0 : i32
    return %c0_i32, %c0_i32_0 : i32, i32
  }
  func.func @transform_11(%arg0: i32) -> (i32, i32, i32) {
    %c0_i32 = arith.constant 0 : i32
    %c0_i32_0 = arith.constant 0 : i32
    %c0_i32_1 = arith.constant 0 : i32
    return %arg0, %c0_i32, %c0_i32_0 : i32, i32, i32
  }
}

</mosaic_0001>

<llo_original>
// kernel: tpu_custom_call.1
$region0: #{tpu_custom_call.1}
  #allocation0 [shape = 'u32[]', space=smem, size = 0x4, offset = 0x4, fixed_abs, tag = 'smem constant byte address 0x4 - core index']
  #allocation1 [shape = 'u32[72,128]{1,0:T(1,128)}', space=vmem, size = 0x9000, scoped, tag = 'internal scratch']
  #allocation2 [shape = 'bf16[8,32]{1,0:T(8,128)(2,1)}', space=vmem, size = 0x800, scoped, tag = 'scratch operand']
  %s0 = inlined_call_operand.hbm [shape: f32[2,8,32], index: 0, kind: input, shape index: {}]
  %s1 = inlined_call_operand.hbm [shape: f32[2,8,32], index: 1, kind: input, shape index: {}]
  %s2 = inlined_call_operand.hbm [shape: f32[2,8,32], index: 2, kind: input, shape index: {}]
  %s3 = inlined_call_operand.hbm [shape: bf16[32,32], index: 3, kind: input, shape index: {}]
  %s4 = inlined_call_operand.vmem [shape: f32[1,32], index: 4, kind: input, shape index: {}]
  %s5 = inlined_call_operand.hbm [shape: bf16[32,32], index: 5, kind: input, shape index: {}]
  %s6 = inlined_call_operand.vmem [shape: f32[1,32], index: 6, kind: input, shape index: {}]
  %s7 = inlined_call_operand.hbm [shape: bf16[32,32], index: 7, kind: input, shape index: {}]
  %s8 = inlined_call_operand.vmem [shape: f32[1,32], index: 8, kind: input, shape index: {}]
  %s9 = inlined_call_operand.hbm [shape: bf16[32,32], index: 9, kind: input, shape index: {}]
  %s10 = inlined_call_operand.vmem [shape: f32[1,32], index: 10, kind: input, shape index: {}]
  %s11 = inlined_call_operand.hbm [shape: f32[2,8,32], index: 11, kind: output, shape index: {}]
  %s12 = sld [smem:[#allocation0]]
  $region105: #{tpu_custom_call.1} parent=0
    _
  %s14 = ssub.s32 1, %s12
  %s15 = scalar_select 0, %s14, %s12
  $region1: #{tpu_custom_call.1} parent=0
    #allocation3 [shape = 'u8[8192]{0}', space=vmem, size = 0x2000, scoped, tag = 'input window, operand 0']
    #allocation4 [shape = 's32[2]{0}', space=sflag, size = 0x8, scoped, tag = 'scoped memory for tpu_custom_call.1']
    #allocation5 [shape = 's32[2]{0}', space=sflag, size = 0x8, scoped, tag = 'scoped memory for tpu_custom_call.1']
    #allocation6 [shape = 'u8[8192]{0}', space=vmem, size = 0x2000, scoped, tag = 'input window, operand 1']
    #allocation7 [shape = 's32[2]{0}', space=sflag, size = 0x8, scoped, tag = 'scoped memory for tpu_custom_call.1']
    #allocation8 [shape = 'u8[8192]{0}', space=vmem, size = 0x2000, scoped, tag = 'input window, operand 2']
    #allocation9 [shape = 'u8[8192]{0}', space=vmem, size = 0x2000, scoped, tag = 'input window, operand 3, single buffered']
    #allocation10 [shape = 's32[1]{0}', space=sflag, size = 0x4, scoped, tag = 'scoped memory for tpu_custom_call.1']
    #allocation11 [shape = 'u8[8192]{0}', space=vmem, size = 0x2000, scoped, tag = 'input window, operand 5, single buffered']
    #allocation12 [shape = 'u8[8192]{0}', space=vmem, size = 0x2000, scoped, tag = 'input window, operand 7, single buffered']
    #allocation13 [shape = 's32[1]{0}', space=sflag, size = 0x4, scoped, tag = 'scoped memory for tpu_custom_call.1']
    #allocation14 [shape = 'u8[8192]{0}', space=vmem, size = 0x2000, scoped, tag = 'input window, operand 9, single buffered']
    #allocation15 [shape = 'u8[8192]{0}', space=vmem, size = 0x2000, scoped, tag = 'output window, operand 0']
    %16 = vsyncpa [#allocation4], 0
    %s17 = scalar_lea.sflag [#allocation4], 1
    %18 = vsyncpa %s17, 0
    %19 = vsyncpa [#allocation7], 0
    %s20 = scalar_lea.sflag [#allocation7], 1
    %21 = vsyncpa %s20, 0
    %22 = vsyncpa [#allocation10], 0
    %23 = vsyncpa [#allocation13], 0
    %24 = vsyncpa [#allocation5], 0
    %s25 = scalar_lea.sflag [#allocation5], 1
    %26 = vsyncpa %s25, 0
    loop: start=0, step=1, limit=4
    $region2: #{tpu_custom_call.1} parent=1 // loop_pre_header
      _
    $region3: #{tpu_custom_call.1} parent=1 // loop_header
      %s28 = sphi 0, %s32
      %p29 = scmp.ge.s32.totalorder %s28, 4
      %s38 = sphi 0, %s40
      %s41 = sphi 0, %s38
      %s42 = sphi 0, %s41
      %s58 = sphi 0, %s42
      %s64 = sphi 0, %s66
      %s67 = sphi 0, %s64
      %s68 = sphi 0, %s67
      %s84 = sphi 0, %s68
      %s90 = sphi 0, %s92
      %s93 = sphi 0, %s90
      %s94 = sphi 0, %s93
      %s110 = sphi 0, %s94
      %s114 = sphi 0, %s114
      %s116 = sphi 0, %s114
      %s117 = sphi 0, %s116
      %s131 = sphi 0, %s117
      %s135 = sphi 0, %s135
      %s137 = sphi 0, %s135
      %s138 = sphi 0, %s137
      %s152 = sphi 0, %s138
      %s156 = sphi 0, %s156
      %s158 = sphi 0, %s156
      %s159 = sphi 0, %s158
      %s173 = sphi 0, %s159
      %s177 = sphi 0, %s177
      %s179 = sphi 0, %s177
      %s180 = sphi 0, %s179
      %s194 = sphi 0, %s180
      %s198 = sphi 0, %s198
      %s200 = sphi 0, %s198
      %s201 = sphi 0, %s200
      %s215 = sphi 0, %s201
      %s219 = sphi 0, %s219
      %s221 = sphi 0, %s219
      %s222 = sphi 0, %s221
      %s236 = sphi 0, %s222
      %s240 = sphi 0, %s240
      %s242 = sphi 0, %s240
      %s243 = sphi 0, %s242
      %s257 = sphi 0, %s243
      %s261 = sphi 0, %s261
      %s263 = sphi 0, %s261
      %s264 = sphi 0, %s263
      %s278 = sphi 0, %s264
      %s284 = sphi 0, %s286
      %s287 = sphi 0, %s284
      %s288 = sphi 0, %s287
      %s304 = sphi 0, %s288
    $region4: #{tpu_custom_call.1} parent=1 // loop_header_branch
      %31 = sbr.rel (%p29) target = $region8
    $region5: #{tpu_custom_call.1} parent=1 // loop_body
      %s33 = ssub.s32 %s28, 1
      %s34 = ssub.s32 %s28, 2
      %s35 = sadd.s32 %s28, 1
      %s36 = ssub.s32 %s28, %s35
      %p37 = scmp.eq.s32.totalorder %s36, 0
      %s39 = sadd.s32 %s38, 1
      %s40 = scalar_select %p37, %s38, %s39
      %p43 = pneg %p37
      %p44 = scmp.eq.s32.totalorder %s28, 1
      %p45 = por %p43, %p44
      %p46 = scmp.ne.s32.totalorder %s38, %s41
      %p47 = scmp.eq.s32.totalorder %s28, 0
      %p48 = por %p46, %p47
      %p49 = scmp.ne.s32.totalorder %s38, %s41
      %p50 = scmp.eq.s32.totalorder %s33, 1
      %p51 = por %p49, %p50
      %p52 = scmp.ne.s32.totalorder %s41, %s42
      %p53 = scmp.eq.s32.totalorder %s33, 0
      %p54 = por %p52, %p53
      %p55 = scmp.ne.s32.totalorder %s41, %s42
      %p56 = scmp.eq.s32.totalorder %s34, 1
      %p57 = por %p55, %p56
      %p59 = scmp.ne.s32.totalorder %s42, %s58
      %p60 = scmp.eq.s32.totalorder %s34, 0
      %p61 = por %p59, %p60
      %s62 = ssub.s32 %s28, %s35
      %p63 = scmp.eq.s32.totalorder %s62, 0
      %s65 = sadd.s32 %s64, 1
      %s66 = scalar_select %p63, %s64, %s65
      %p69 = pneg %p63
      %p70 = scmp.eq.s32.totalorder %s28, 1
      %p71 = por %p69, %p70
      %p72 = scmp.ne.s32.totalorder %s64, %s67
      %p73 = scmp.eq.s32.totalorder %s28, 0
      %p74 = por %p72, %p73
      %p75 = scmp.ne.s32.totalorder %s64, %s67
      %p76 = scmp.eq.s32.totalorder %s33, 1
      %p77 = por %p75, %p76
      %p78 = scmp.ne.s32.totalorder %s67, %s68
      %p79 = scmp.eq.s32.totalorder %s33, 0
      %p80 = por %p78, %p79
      %p81 = scmp.ne.s32.totalorder %s67, %s68
      %p82 = scmp.eq.s32.totalorder %s34, 1
      %p83 = por %p81, %p82
      %p85 = scmp.ne.s32.totalorder %s68, %s84
      %p86 = scmp.eq.s32.totalorder %s34, 0
      %p87 = por %p85, %p86
      %s88 = ssub.s32 %s28, %s35
      %p89 = scmp.eq.s32.totalorder %s88, 0
      %s91 = sadd.s32 %s90, 1
      %s92 = scalar_select %p89, %s90, %s91
      %p95 = pneg %p89
      %p96 = scmp.eq.s32.totalorder %s28, 1
      %p97 = por %p95, %p96
      %p98 = scmp.ne.s32.totalorder %s90, %s93
      %p99 = scmp.eq.s32.totalorder %s28, 0
      %p100 = por %p98, %p99
      %p101 = scmp.ne.s32.totalorder %s90, %s93
      %p102 = scmp.eq.s32.totalorder %s33, 1
      %p103 = por %p101, %p102
      %p104 = scmp.ne.s32.totalorder %s93, %s94
      %p105 = scmp.eq.s32.totalorder %s33, 0
      %p106 = por %p104, %p105
      %p107 = scmp.ne.s32.totalorder %s93, %s94
      %p108 = scmp.eq.s32.totalorder %s34, 1
      %p109 = por %p107, %p108
      %p111 = scmp.ne.s32.totalorder %s94, %s110
      %p112 = scmp.eq.s32.totalorder %s34, 0
      %p113 = por %p111, %p112
      %s115 = sadd.s32 %s114, 1
      %p118 = scmp.eq.s32.totalorder %s28, 1
      %p119 = scmp.ne.s32.totalorder %s114, %s116
      %p120 = scmp.eq.s32.totalorder %s28, 0
      %p121 = por %p119, %p120
      %p122 = scmp.ne.s32.totalorder %s114, %s116
      %p123 = scmp.eq.s32.totalorder %s33, 1
      %p124 = por %p122, %p123
      %p125 = scmp.ne.s32.totalorder %s116, %s117
      %p126 = scmp.eq.s32.totalorder %s33, 0
      %p127 = por %p125, %p126
      %p128 = scmp.ne.s32.totalorder %s116, %s117
      %p129 = scmp.eq.s32.totalorder %s34, 1
      %p130 = por %p128, %p129
      %p132 = scmp.ne.s32.totalorder %s117, %s131
      %p133 = scmp.eq.s32.totalorder %s34, 0
      %p134 = por %p132, %p133
      %s136 = sadd.s32 %s135, 1
      %p139 = scmp.eq.s32.totalorder %s28, 1
      %p140 = scmp.ne.s32.totalorder %s135, %s137
      %p141 = scmp.eq.s32.totalorder %s28, 0
      %p142 = por %p140, %p141
      %p143 = scmp.ne.s32.totalorder %s135, %s137
      %p144 = scmp.eq.s32.totalorder %s33, 1
      %p145 = por %p143, %p144
      %p146 = scmp.ne.s32.totalorder %s137, %s138
      %p147 = scmp.eq.s32.totalorder %s33, 0
      %p148 = por %p146, %p147
      %p149 = scmp.ne.s32.totalorder %s137, %s138
      %p150 = scmp.eq.s32.totalorder %s34, 1
      %p151 = por %p149, %p150
      %p153 = scmp.ne.s32.totalorder %s138, %s152
      %p154 = scmp.eq.s32.totalorder %s34, 0
      %p155 = por %p153, %p154
      %s157 = sadd.s32 %s156, 1
      %p160 = scmp.eq.s32.totalorder %s28, 1
      %p161 = scmp.ne.s32.totalorder %s156, %s158
      %p162 = scmp.eq.s32.totalorder %s28, 0
      %p163 = por %p161, %p162
      %p164 = scmp.ne.s32.totalorder %s156, %s158
      %p165 = scmp.eq.s32.totalorder %s33, 1
      %p166 = por %p164, %p165
      %p167 = scmp.ne.s32.totalorder %s158, %s159
      %p168 = scmp.eq.s32.totalorder %s33, 0
      %p169 = por %p167, %p168
      %p170 = scmp.ne.s32.totalorder %s158, %s159
      %p171 = scmp.eq.s32.totalorder %s34, 1
      %p172 = por %p170, %p171
      %p174 = scmp.ne.s32.totalorder %s159, %s173
      %p175 = scmp.eq.s32.totalorder %s34, 0
      %p176 = por %p174, %p175
      %s178 = sadd.s32 %s177, 1
      %p181 = scmp.eq.s32.totalorder %s28, 1
      %p182 = scmp.ne.s32.totalorder %s177, %s179
      %p183 = scmp.eq.s32.totalorder %s28, 0
      %p184 = por %p182, %p183
      %p185 = scmp.ne.s32.totalorder %s177, %s179
      %p186 = scmp.eq.s32.totalorder %s33, 1
      %p187 = por %p185, %p186
      %p188 = scmp.ne.s32.totalorder %s179, %s180
      %p189 = scmp.eq.s32.totalorder %s33, 0
      %p190 = por %p188, %p189
      %p191 = scmp.ne.s32.totalorder %s179, %s180
      %p192 = scmp.eq.s32.totalorder %s34, 1
      %p193 = por %p191, %p192
      %p195 = scmp.ne.s32.totalorder %s180, %s194
      %p196 = scmp.eq.s32.totalorder %s34, 0
      %p197 = por %p195, %p196
      %s199 = sadd.s32 %s198, 1
      %p202 = scmp.eq.s32.totalorder %s28, 1
      %p203 = scmp.ne.s32.totalorder %s198, %s200
      %p204 = scmp.eq.s32.totalorder %s28, 0
      %p205 = por %p203, %p204
      %p206 = scmp.ne.s32.totalorder %s198, %s200
      %p207 = scmp.eq.s32.totalorder %s33, 1
      %p208 = por %p206, %p207
      %p209 = scmp.ne.s32.totalorder %s200, %s201
      %p210 = scmp.eq.s32.totalorder %s33, 0
      %p211 = por %p209, %p210
      %p212 = scmp.ne.s32.totalorder %s200, %s201
      %p213 = scmp.eq.s32.totalorder %s34, 1
      %p214 = por %p212, %p213
      %p216 = scmp.ne.s32.totalorder %s201, %s215
      %p217 = scmp.eq.s32.totalorder %s34, 0
      %p218 = por %p216, %p217
      %s220 = sadd.s32 %s219, 1
      %p223 = scmp.eq.s32.totalorder %s28, 1
      %p224 = scmp.ne.s32.totalorder %s219, %s221
      %p225 = scmp.eq.s32.totalorder %s28, 0
      %p226 = por %p224, %p225
      %p227 = scmp.ne.s32.totalorder %s219, %s221
      %p228 = scmp.eq.s32.totalorder %s33, 1
      %p229 = por %p227, %p228
      %p230 = scmp.ne.s32.totalorder %s221, %s222
      %p231 = scmp.eq.s32.totalorder %s33, 0
      %p232 = por %p230, %p231
      %p233 = scmp.ne.s32.totalorder %s221, %s222
      %p234 = scmp.eq.s32.totalorder %s34, 1
      %p235 = por %p233, %p234
      %p237 = scmp.ne.s32.totalorder %s222, %s236
      %p238 = scmp.eq.s32.totalorder %s34, 0
      %p239 = por %p237, %p238
      %s241 = sadd.s32 %s240, 1
      %p244 = scmp.eq.s32.totalorder %s28, 1
      %p245 = scmp.ne.s32.totalorder %s240, %s242
      %p246 = scmp.eq.s32.totalorder %s28, 0
      %p247 = por %p245, %p246
      %p248 = scmp.ne.s32.totalorder %s240, %s242
      %p249 = scmp.eq.s32.totalorder %s33, 1
      %p250 = por %p248, %p249
      %p251 = scmp.ne.s32.totalorder %s242, %s243
      %p252 = scmp.eq.s32.totalorder %s33, 0
      %p253 = por %p251, %p252
      %p254 = scmp.ne.s32.totalorder %s242, %s243
      %p255 = scmp.eq.s32.totalorder %s34, 1
      %p256 = por %p254, %p255
      %p258 = scmp.ne.s32.totalorder %s243, %s257
      %p259 = scmp.eq.s32.totalorder %s34, 0
      %p260 = por %p258, %p259
      %s262 = sadd.s32 %s261, 1
      %p265 = scmp.eq.s32.totalorder %s28, 1
      %p266 = scmp.ne.s32.totalorder %s261, %s263
      %p267 = scmp.eq.s32.totalorder %s28, 0
      %p268 = por %p266, %p267
      %p269 = scmp.ne.s32.totalorder %s261, %s263
      %p270 = scmp.eq.s32.totalorder %s33, 1
      %p271 = por %p269, %p270
      %p272 = scmp.ne.s32.totalorder %s263, %s264
      %p273 = scmp.eq.s32.totalorder %s33, 0
      %p274 = por %p272, %p273
      %p275 = scmp.ne.s32.totalorder %s263, %s264
      %p276 = scmp.eq.s32.totalorder %s34, 1
      %p277 = por %p275, %p276
      %p279 = scmp.ne.s32.totalorder %s264, %s278
      %p280 = scmp.eq.s32.totalorder %s34, 0
      %p281 = por %p279, %p280
      %s282 = ssub.s32 %s28, %s35
      %p283 = scmp.eq.s32.totalorder %s282, 0
      %s285 = sadd.s32 %s284, 1
      %s286 = scalar_select %p283, %s284, %s285
      %p289 = pneg %p283
      %p290 = scmp.eq.s32.totalorder %s28, 1
      %p291 = por %p289, %p290
      %p292 = scmp.ne.s32.totalorder %s284, %s287
      %p293 = scmp.eq.s32.totalorder %s28, 0
      %p294 = por %p292, %p293
      %p295 = scmp.ne.s32.totalorder %s284, %s287
      %p296 = scmp.eq.s32.totalorder %s33, 1
      %p297 = por %p295, %p296
      %p298 = scmp.ne.s32.totalorder %s287, %s288
      %p299 = scmp.eq.s32.totalorder %s33, 0
      %p300 = por %p298, %p299
      %p301 = scmp.ne.s32.totalorder %s287, %s288
      %p302 = scmp.eq.s32.totalorder %s34, 1
      %p303 = por %p301, %p302
      %p305 = scmp.ne.s32.totalorder %s288, %s304
      %p306 = scmp.eq.s32.totalorder %s34, 0
      %p307 = por %p305, %p306
      %p308 = scmp.le.s32.totalorder 1, %s28
      %p309 = scmp.lt.s32.totalorder %s28, 3
      %p310 = pnand %p308, %p309
      %p311 = pneg %p310
      // Predicated region
      $region9: #{tpu_custom_call.1} parent=5 // pred_check
        _
      $region10: #{tpu_custom_call.1} parent=5 // pred_check_branch
        %313 = sbr.rel (%p310) target = $region12
      $region11: #{tpu_custom_call.1} parent=5 // pred_region
        %s314 = ssub.s32 %s28, 1
        // Predicated region
        $region13: #{tpu_custom_call.1} parent=11 // pred_check
          %p315 = pneg %p127
        $region14: #{tpu_custom_call.1} parent=11 // pred_check_branch
          %317 = sbr.rel (%p315) target = $region16
        $region15: #{tpu_custom_call.1} parent=11 // pred_region
          %319 = vsyncadd [#allocation10], 0
          %s320 = sshll.u32 %s3, 4
          %s321 = int_to_ptr.hbm [resolvable:$true] %s320
          %s322 = sshll.u32 [#allocation9], 4
          %s323 = int_to_ptr.vmem [resolvable:$true] %s322
          %328 = dma.hbm_to_vmem [thread:$0]  %s321, 256, %s323, [#allocation10], 64, 64, 4
        $region16: #{tpu_custom_call.1} parent=11 // pred_fallthru
          _
        // Predicated region
        $region17: #{tpu_custom_call.1} parent=11 // pred_check
          %p329 = pneg %p148
        $region18: #{tpu_custom_call.1} parent=11 // pred_check_branch
          %331 = sbr.rel (%p329) target = $region20
        $region19: #{tpu_custom_call.1} parent=11 // pred_region
          _
        $region20: #{tpu_custom_call.1} parent=11 // pred_fallthru
          _
        // Predicated region
        $region21: #{tpu_custom_call.1} parent=11 // pred_check
          %p332 = pneg %p169
        $region22: #{tpu_custom_call.1} parent=11 // pred_check_branch
          %334 = sbr.rel (%p332) target = $region24
        $region23: #{tpu_custom_call.1} parent=11 // pred_region
          %336 = vsyncadd [#allocation10], 0
          %s337 = sshll.u32 %s5, 4
          %s338 = int_to_ptr.hbm [resolvable:$true] %s337
          %s339 = sshll.u32 [#allocation11], 4
          %s340 = int_to_ptr.vmem [resolvable:$true] %s339
          %345 = dma.hbm_to_vmem [thread:$0]  %s338, 256, %s340, [#allocation10], 64, 64, 4
        $region24: #{tpu_custom_call.1} parent=11 // pred_fallthru
          _
        // Predicated region
        $region25: #{tpu_custom_call.1} parent=11 // pred_check
          %p346 = pneg %p190
        $region26: #{tpu_custom_call.1} parent=11 // pred_check_branch
          %348 = sbr.rel (%p346) target = $region28
        $region27: #{tpu_custom_call.1} parent=11 // pred_region
          _
        $region28: #{tpu_custom_call.1} parent=11 // pred_fallthru
          _
        // Predicated region
        $region29: #{tpu_custom_call.1} parent=11 // pred_check
          %p349 = pneg %p211
        $region30: #{tpu_custom_call.1} parent=11 // pred_check_branch
          %351 = sbr.rel (%p349) target = $region32
        $region31: #{tpu_custom_call.1} parent=11 // pred_region
          %353 = vsyncadd [#allocation13], 0
          %s354 = sshll.u32 %s7, 4
          %s355 = int_to_ptr.hbm [resolvable:$true] %s354
          %s356 = sshll.u32 [#allocation12], 4
          %s357 = int_to_ptr.vmem [resolvable:$true] %s356
          %362 = dma.hbm_to_vmem [thread:$0]  %s355, 256, %s357, [#allocation13], 64, 64, 4
        $region32: #{tpu_custom_call.1} parent=11 // pred_fallthru
          _
        // Predicated region
        $region33: #{tpu_custom_call.1} parent=11 // pred_check
          %p363 = pneg %p232
        $region34: #{tpu_custom_call.1} parent=11 // pred_check_branch
          %365 = sbr.rel (%p363) target = $region36
        $region35: #{tpu_custom_call.1} parent=11 // pred_region
          _
        $region36: #{tpu_custom_call.1} parent=11 // pred_fallthru
          _
        // Predicated region
        $region37: #{tpu_custom_call.1} parent=11 // pred_check
          %p366 = pneg %p253
        $region38: #{tpu_custom_call.1} parent=11 // pred_check_branch
          %368 = sbr.rel (%p366) target = $region40
        $region39: #{tpu_custom_call.1} parent=11 // pred_region
          %370 = vsyncadd [#allocation13], 0
          %s371 = sshll.u32 %s9, 4
          %s372 = int_to_ptr.hbm [resolvable:$true] %s371
          %s373 = sshll.u32 [#allocation14], 4
          %s374 = int_to_ptr.vmem [resolvable:$true] %s373
          %379 = dma.hbm_to_vmem [thread:$0]  %s372, 256, %s374, [#allocation13], 64, 64, 4
        $region40: #{tpu_custom_call.1} parent=11 // pred_fallthru
          _
        // Predicated region
        $region41: #{tpu_custom_call.1} parent=11 // pred_check
          %p380 = pneg %p274
        $region42: #{tpu_custom_call.1} parent=11 // pred_check_branch
          %382 = sbr.rel (%p380) target = $region44
        $region43: #{tpu_custom_call.1} parent=11 // pred_region
          _
        $region44: #{tpu_custom_call.1} parent=11 // pred_fallthru
          _
      $region12: #{tpu_custom_call.1} parent=5 // pred_fallthru
        _
      %p383 = scmp.lt.s32.totalorder %s28, 2
      // Predicated region
      $region45: #{tpu_custom_call.1} parent=5 // pred_check
        %p384 = pneg %p383
      $region46: #{tpu_custom_call.1} parent=5 // pred_check_branch
        %386 = sbr.rel (%p384) target = $region48
      $region47: #{tpu_custom_call.1} parent=5 // pred_region
        // Predicated region
        $region49: #{tpu_custom_call.1} parent=47 // pred_check
          %p387 = pneg %p48
        $region50: #{tpu_custom_call.1} parent=47 // pred_check_branch
          %389 = sbr.rel (%p387) target = $region52
        $region51: #{tpu_custom_call.1} parent=47 // pred_region
          %s390 = sand.u32 %s38, 1
          %s391 = scalar_lea.sflag [#allocation4], %s390
          %s392 = sand.u32 %s38, 1
          %s393 = smul.addr %s392, 8
          %s394 = scalar_lea.vmem [#allocation3], %s393
          %396 = vsyncadd %s391, 0
          %s397 = smul.addr %s28, 8
          %s398 = scalar_lea.hbm %s0, %s397
          %s400 = sshll.u32 %s398, 4
          %s401 = int_to_ptr.hbm [resolvable:$true] %s400
          %s402 = sshll.u32 %s394, 4
          %s403 = int_to_ptr.vmem [resolvable:$true] %s402
          %405 = dma.hbm_to_vmem [thread:$0]  %s401, 128, %s403, %s391
        $region52: #{tpu_custom_call.1} parent=47 // pred_fallthru
          _
        // Predicated region
        $region53: #{tpu_custom_call.1} parent=47 // pred_check
          %p406 = pneg %p74
        $region54: #{tpu_custom_call.1} parent=47 // pred_check_branch
          %408 = sbr.rel (%p406) target = $region56
        $region55: #{tpu_custom_call.1} parent=47 // pred_region
          %s409 = sand.u32 %s28, 1
          %s410 = scalar_lea.sflag [#allocation7], %s409
          %s411 = sand.u32 %s64, 1
          %s412 = smul.addr %s411, 8
          %s413 = scalar_lea.vmem [#allocation6], %s412
          %415 = vsyncadd %s410, 0
          %s416 = smul.addr %s28, 8
          %s417 = scalar_lea.hbm %s1, %s416
          %s419 = sshll.u32 %s417, 4
          %s420 = int_to_ptr.hbm [resolvable:$true] %s419
          %s421 = sshll.u32 %s413, 4
          %s422 = int_to_ptr.vmem [resolvable:$true] %s421
          %424 = dma.hbm_to_vmem [thread:$0]  %s420, 128, %s422, %s410
        $region56: #{tpu_custom_call.1} parent=47 // pred_fallthru
          _
        // Predicated region
        $region57: #{tpu_custom_call.1} parent=47 // pred_check
          %p425 = pneg %p100
        $region58: #{tpu_custom_call.1} parent=47 // pred_check_branch
          %427 = sbr.rel (%p425) target = $region60
        $region59: #{tpu_custom_call.1} parent=47 // pred_region
          %s428 = sand.u32 %s28, 1
          %s429 = scalar_lea.sflag [#allocation7], %s428
          %s430 = sand.u32 %s90, 1
          %s431 = smul.addr %s430, 8
          %s432 = scalar_lea.vmem [#allocation8], %s431
          %434 = vsyncadd %s429, 0
          %s435 = smul.addr %s28, 8
          %s436 = scalar_lea.hbm %s2, %s435
          %s438 = sshll.u32 %s436, 4
          %s439 = int_to_ptr.hbm [resolvable:$true] %s438
          %s440 = sshll.u32 %s432, 4
          %s441 = int_to_ptr.vmem [resolvable:$true] %s440
          %443 = dma.hbm_to_vmem [thread:$0]  %s439, 128, %s441, %s429
        $region60: #{tpu_custom_call.1} parent=47 // pred_fallthru
          _
      $region48: #{tpu_custom_call.1} parent=5 // pred_fallthru
        _
      %p444 = scmp.le.s32.totalorder 1, %s28
      %p445 = scmp.lt.s32.totalorder %s28, 3
      %p446 = pnand %p444, %p445
      %p447 = pneg %p446
      // Predicated region
      $region61: #{tpu_custom_call.1} parent=5 // pred_check
        _
      $region62: #{tpu_custom_call.1} parent=5 // pred_check_branch
        %449 = sbr.rel (%p446) target = $region64
      $region63: #{tpu_custom_call.1} parent=5 // pred_region
        %s450 = ssub.s32 %s28, 1
        %s451 = sand.u32 %s41, 1
        %s452 = scalar_lea.sflag [#allocation4], %s451
        %s453 = sand.u32 %s41, 1
        %s454 = smul.addr %s453, 8
        %s455 = scalar_lea.vmem [#allocation3], %s454
        // Predicated region
        $region65: #{tpu_custom_call.1} parent=63 // pred_check
          %p456 = pneg %p54
        $region66: #{tpu_custom_call.1} parent=63 // pred_check_branch
          %458 = sbr.rel (%p456) target = $region68
        $region67: #{tpu_custom_call.1} parent=63 // pred_region
          %460 = dma.done %s452, 128
        $region68: #{tpu_custom_call.1} parent=63 // pred_fallthru
          _
        %s461 = sand.u32 %s33, 1
        %s462 = scalar_lea.sflag [#allocation7], %s461
        %s463 = sand.u32 %s67, 1
        %s464 = smul.addr %s463, 8
        %s465 = scalar_lea.vmem [#allocation6], %s464
        // Predicated region
        $region69: #{tpu_custom_call.1} parent=63 // pred_check
          %p466 = pneg %p80
        $region70: #{tpu_custom_call.1} parent=63 // pred_check_branch
          %468 = sbr.rel (%p466) target = $region72
        $region71: #{tpu_custom_call.1} parent=63 // pred_region
          %470 = dma.done %s462, 128
        $region72: #{tpu_custom_call.1} parent=63 // pred_fallthru
          _
        %s471 = sand.u32 %s33, 1
        %s472 = scalar_lea.sflag [#allocation7], %s471
        %s473 = sand.u32 %s93, 1
        %s474 = smul.addr %s473, 8
        %s475 = scalar_lea.vmem [#allocation8], %s474
        // Predicated region
        $region73: #{tpu_custom_call.1} parent=63 // pred_check
          %p476 = pneg %p106
        $region74: #{tpu_custom_call.1} parent=63 // pred_check_branch
          %478 = sbr.rel (%p476) target = $region76
        $region75: #{tpu_custom_call.1} parent=63 // pred_region
          %480 = dma.done %s472, 128
        $region76: #{tpu_custom_call.1} parent=63 // pred_fallthru
          _
        // Predicated region
        $region77: #{tpu_custom_call.1} parent=63 // pred_check
          %p481 = pneg %p127
        $region78: #{tpu_custom_call.1} parent=63 // pred_check_branch
          %483 = sbr.rel (%p481) target = $region80
        $region79: #{tpu_custom_call.1} parent=63 // pred_region
          %485 = dma.done [#allocation10], 256
        $region80: #{tpu_custom_call.1} parent=63 // pred_fallthru
          _
        // Predicated region
        $region81: #{tpu_custom_call.1} parent=63 // pred_check
          %p486 = pneg %p169
        $region82: #{tpu_custom_call.1} parent=63 // pred_check_branch
          %488 = sbr.rel (%p486) target = $region84
        $region83: #{tpu_custom_call.1} parent=63 // pred_region
          %490 = dma.done [#allocation10], 256
        $region84: #{tpu_custom_call.1} parent=63 // pred_fallthru
          _
        // Predicated region
        $region85: #{tpu_custom_call.1} parent=63 // pred_check
          %p491 = pneg %p211
        $region86: #{tpu_custom_call.1} parent=63 // pred_check_branch
          %493 = sbr.rel (%p491) target = $region88
        $region87: #{tpu_custom_call.1} parent=63 // pred_region
          %495 = dma.done [#allocation13], 256
        $region88: #{tpu_custom_call.1} parent=63 // pred_fallthru
          _
        // Predicated region
        $region89: #{tpu_custom_call.1} parent=63 // pred_check
          %p496 = pneg %p253
        $region90: #{tpu_custom_call.1} parent=63 // pred_check_branch
          %498 = sbr.rel (%p496) target = $region92
        $region91: #{tpu_custom_call.1} parent=63 // pred_region
          %500 = dma.done [#allocation13], 256
        $region92: #{tpu_custom_call.1} parent=63 // pred_fallthru
          _
        %s501 = sand.u32 %s41, 1
        %s502 = scalar_lea.sflag [#allocation4], %s501
        %s503 = sand.u32 %s41, 1
        %s504 = smul.addr %s503, 8
        %s505 = scalar_lea.vmem [#allocation3], %s504
        %p506 = pneg %p54
        %p507 = pneg %p51
        %s508 = sand.u32 %s33, 1
        %s509 = scalar_lea.sflag [#allocation7], %s508
        %s510 = sand.u32 %s67, 1
        %s511 = smul.addr %s510, 8
        %s512 = scalar_lea.vmem [#allocation6], %s511
        %p513 = pneg %p80
        %p514 = pneg %p77
        %s515 = sand.u32 %s33, 1
        %s516 = scalar_lea.sflag [#allocation7], %s515
        %s517 = sand.u32 %s93, 1
        %s518 = smul.addr %s517, 8
        %s519 = scalar_lea.vmem [#allocation8], %s518
        %p520 = pneg %p106
        %p521 = pneg %p103
        %p522 = pneg %p127
        %p523 = pneg %p124
        %p524 = pneg %p148
        %p525 = pneg %p145
        %p526 = pneg %p169
        %p527 = pneg %p166
        %p528 = pneg %p190
        %p529 = pneg %p187
        %p530 = pneg %p211
        %p531 = pneg %p208
        %p532 = pneg %p232
        %p533 = pneg %p229
        %p534 = pneg %p253
        %p535 = pneg %p250
        %p536 = pneg %p274
        %p537 = pneg %p271
        %p538 = pneg %p300
        %p539 = pneg %p297
        %s540 = sand.u32 %s287, 1
        %s541 = scalar_lea.sflag [#allocation5], %s540
        %s542 = sand.u32 %s287, 1
        %s543 = smul.addr %s542, 8
        %s544 = scalar_lea.vmem [#allocation15], %s543
        %v546 = vld [vmem:[%s455] sm:$0xff]
        %v547 = vpack.c.bf16 %v546, %v546
        %v548 = vld [vmem:[%s465] sm:$0xff]
        %v549 = vpack.c.bf16 %v548, %v548
        %v550 = vld [vmem:[%s475] sm:$0xff]
        %v551 = vpack.c.bf16 %v550, %v550
        %v552 = vld [vmem:[#allocation9] sm:$0xf]
        %v553 = vld [vmem:[#allocation9 + $0x4] sm:$0xf]
        %v554 = vld [vmem:[#allocation9 + $0x8] sm:$0xf]
        %v555 = vld [vmem:[#allocation9 + $0xc] sm:$0xf]
        %v556 = vld [vmem:[%s4] sm:$0x1]
        %v558 = vperm.slane %v556, 0
        %v564 = vunpack.c.l.b16 %v552
        %v565 = vunpack.c.l.b16 %v553
        %v566 = vunpack.c.l.b16 %v554
        %v567 = vunpack.c.l.b16 %v555
        %v568 = vpack.c.b16 %v565, %v564
        %v569 = vpack.c.b16 %v567, %v566
        %vm572 = vcmask 261120
        %v574 = vsel %vm572, %v547, 0
        %576 = vmatpush.bf16.msra.mxu0 0
        %577 = vmatpush.bf16.msra.mxu0 0
        %578 = vmatpush.bf16.msra.mxu0 0
        %579 = vmatpush.bf16.msra.mxu0 0
        %580 = vmatpush.bf16.msra.mxu0 0
        %581 = vmatpush.bf16.msra.mxu0 0
        %582 = vmatpush.bf16.msra.mxu0 %v569
        %583 = vmatpush.bf16.msra.mxu0 %v568
        %584 = vmatmul.bf16.gmra.mxu0 %v574
        %v585 = vpop.f32.mrf.mxu0
        %v586 = vadd.f32 %v558, %v585
        %v587 = vpop.f32.mrf.mxu0
        %588 = vdwg.mxu0
        %v589 = vld [vmem:[#allocation11] sm:$0xf]
        %v590 = vld [vmem:[#allocation11 + $0x4] sm:$0xf]
        %v591 = vld [vmem:[#allocation11 + $0x8] sm:$0xf]
        %v592 = vld [vmem:[#allocation11 + $0xc] sm:$0xf]
        %v593 = vld [vmem:[%s6] sm:$0x1]
        %v595 = vperm.slane %v593, 0
        %v601 = vunpack.c.l.b16 %v589
        %v602 = vunpack.c.l.b16 %v590
        %v603 = vunpack.c.l.b16 %v591
        %v604 = vunpack.c.l.b16 %v592
        %v605 = vpack.c.b16 %v602, %v601
        %v606 = vpack.c.b16 %v604, %v603
        %v610 = vsel %vm572, %v549, 0
        %612 = vmatpush.bf16.msra.mxu0 0
        %613 = vmatpush.bf16.msra.mxu0 0
        %614 = vmatpush.bf16.msra.mxu0 0
        %615 = vmatpush.bf16.msra.mxu0 0
        %616 = vmatpush.bf16.msra.mxu0 0
        %617 = vmatpush.bf16.msra.mxu0 0
        %618 = vmatpush.bf16.msra.mxu0 %v606
        %619 = vmatpush.bf16.msra.mxu0 %v605
        %620 = vmatmul.bf16.gmra.mxu0 %v610
        %v621 = vpop.f32.mrf.mxu0
        %v622 = vadd.f32 %v595, %v621
        %v623 = vpop.f32.mrf.mxu0
        %624 = vdwg.mxu0
        %v625 = vld [vmem:[#allocation12] sm:$0xf]
        %v626 = vld [vmem:[#allocation12 + $0x4] sm:$0xf]
        %v627 = vld [vmem:[#allocation12 + $0x8] sm:$0xf]
        %v628 = vld [vmem:[#allocation12 + $0xc] sm:$0xf]
        %v629 = vld [vmem:[%s8] sm:$0x1]
        %v631 = vperm.slane %v629, 0
        %v637 = vunpack.c.l.b16 %v625
        %v638 = vunpack.c.l.b16 %v626
        %v639 = vunpack.c.l.b16 %v627
        %v640 = vunpack.c.l.b16 %v628
        %v641 = vpack.c.b16 %v638, %v637
        %v642 = vpack.c.b16 %v640, %v639
        %v646 = vsel %vm572, %v551, 0
        %648 = vmatpush.bf16.msra.mxu0 0
        %649 = vmatpush.bf16.msra.mxu0 0
        %650 = vmatpush.bf16.msra.mxu0 0
        %651 = vmatpush.bf16.msra.mxu0 0
        %652 = vmatpush.bf16.msra.mxu0 0
        %653 = vmatpush.bf16.msra.mxu0 0
        %654 = vmatpush.bf16.msra.mxu0 %v642
        %655 = vmatpush.bf16.msra.mxu0 %v641
        %656 = vmatmul.bf16.gmra.mxu0 %v646
        %v657 = vpop.f32.mrf.mxu0
        %v658 = vadd.f32 %v631, %v657
        %v659 = vpop.f32.mrf.mxu0
        %660 = vdwg.mxu0
        %v661 = vmul.f32 %v586, 0.35355338
        %v662 = vpack.c.bf16 %v661, %v661
        %v663 = vpack.c.bf16 %v622, %v622
        %v664 = vpack.c.bf16 %v658, %v658
        %vm665 = vcmask 64512
        %v667 = vsel %vm665, %v662, 0
        %v670 = vsel %vm665, %v663, 0
        %672 = vmatpush.bf16.xpose.msra.mxu0 0
        %673 = vmatpush.bf16.xpose.msra.mxu0 0
        %674 = vmatpush.bf16.xpose.msra.mxu0 0
        %675 = vmatpush.bf16.xpose.msra.mxu0 0
        %676 = vmatpush.bf16.xpose.msra.mxu0 0
        %677 = vmatpush.bf16.xpose.msra.mxu0 0
        %678 = vmatpush.bf16.xpose.msra.mxu0 0
        %679 = vmatpush.bf16.xpose.msra.mxu0 %v670
        %680 = vmatmul.bf16.gmra.mxu0 %v667
        %v681 = vpop.f32.mrf.mxu0
        %v682 = vadd.f32 0.0, %v681
        %v683 = vpop.f32.mrf.mxu0
        %684 = vdwg.mxu0
        %v685 = vsel %vm665, %v682, -inf
        %686 = vmax.xlane.f32.xlu0 %v685
        %v687 = vpop.xlane.xlu0 %686
        %v688 = vsub.f32 %v682, %v687
        %v689 = vmul.f32 %v688, 1.442695
        %v690 = vpow.pop %v689
        %v691 = vsel %vm665, %v690, 0.0
        %692 = vadd.xlane.f32.xlu0 %v691
        %v693 = vpop.xlane.xlu0 %692
        %v694 = vpack.c.bf16 %v690, %v690
        %v696 = vsel %vm665, %v694, 0
        %vm698 = vcmask 1043456
        %v700 = vsel %vm698, %v664, 0
        %702 = vmatpush.bf16.msra.mxu0 0
        %703 = vmatpush.bf16.msra.mxu0 0
        %704 = vmatpush.bf16.msra.mxu0 0
        %705 = vmatpush.bf16.msra.mxu0 0
        %706 = vmatpush.bf16.msra.mxu0 0
        %707 = vmatpush.bf16.msra.mxu0 0
        %708 = vmatpush.bf16.msra.mxu0 0
        %709 = vmatpush.bf16.msra.mxu0 %v700
        %710 = vmatmul.bf16.gmra.mxu0 %v696
        %v711 = vpop.f32.mrf.mxu0
        %v712 = vadd.f32 0.0, %v711
        %v713 = vpop.f32.mrf.mxu0
        %714 = vdwg.mxu0
        %v715 = vrcp.pop %v693
        %v716 = vmul.f32 %v712, %v715
        %v717 = vpack.c.bf16 %v716, %v716
        %vm718 = vcmask 60416
        %719 = vst.msk [vmem:[#allocation2] sm:$0xf] %vm718, %v717
        %v721 = vunpack.c.l.b16 %v662
        %v722 = vpack.c.b16 %v721, %v721
        %723 = vrot.lane.b32.xlu0 %v722, 120
        %v724 = vpop.permute.xlu0 %723
        %v726 = vunpack.c.l.b16 %v663
        %v727 = vpack.c.b16 %v726, %v726
        %728 = vrot.lane.b32.xlu0 %v727, 120
        %v729 = vpop.permute.xlu0 %728
        %v731 = vsel %vm665, %v724, 0
        %v734 = vsel %vm665, %v729, 0
        %736 = vmatpush.bf16.xpose.msra.mxu0 0
        %737 = vmatpush.bf16.xpose.msra.mxu0 0
        %738 = vmatpush.bf16.xpose.msra.mxu0 0
        %739 = vmatpush.bf16.xpose.msra.mxu0 0
        %740 = vmatpush.bf16.xpose.msra.mxu0 0
        %741 = vmatpush.bf16.xpose.msra.mxu0 0
        %742 = vmatpush.bf16.xpose.msra.mxu0 0
        %743 = vmatpush.bf16.xpose.msra.mxu0 %v734
        %744 = vmatmul.bf16.gmra.mxu0 %v731
        %v745 = vpop.f32.mrf.mxu0
        %v746 = vadd.f32 0.0, %v745
        %v747 = vpop.f32.mrf.mxu0
        %748 = vdwg.mxu0
        %v749 = vsel %vm665, %v746, -inf
        %750 = vmax.xlane.f32.xlu0 %v749
        %v751 = vpop.xlane.xlu0 %750
        %v752 = vsub.f32 %v746, %v751
        %v753 = vmul.f32 %v752, 1.442695
        %v754 = vpow.pop %v753
        %v755 = vsel %vm665, %v754, 0.0
        %756 = vadd.xlane.f32.xlu0 %v755
        %v757 = vpop.xlane.xlu0 %756
        %v758 = vpack.c.bf16 %v754, %v754
        %v760 = vunpack.c.l.b16 %v664
        %v761 = vpack.c.b16 %v760, %v760
        %762 = vrot.lane.b32.xlu0 %v761, 120
        %v763 = vpop.permute.xlu0 %762
        %v765 = vsel %vm665, %v758, 0
        %v768 = vsel %vm698, %v763, 0
        %770 = vmatpush.bf16.msra.mxu0 0
        %771 = vmatpush.bf16.msra.mxu0 0
        %772 = vmatpush.bf16.msra.mxu0 0
        %773 = vmatpush.bf16.msra.mxu0 0
        %774 = vmatpush.bf16.msra.mxu0 0
        %775 = vmatpush.bf16.msra.mxu0 0
        %776 = vmatpush.bf16.msra.mxu0 0
        %777 = vmatpush.bf16.msra.mxu0 %v768
        %778 = vmatmul.bf16.gmra.mxu0 %v765
        %v779 = vpop.f32.mrf.mxu0
        %v780 = vadd.f32 0.0, %v779
        %v781 = vpop.f32.mrf.mxu0
        %782 = vdwg.mxu0
        %v783 = vrcp.pop %v757
        %v784 = vmul.f32 %v780, %v783
        %v785 = vpack.c.bf16 %v784, %v784
        %787 = vrot.lane.b32.xlu0 %v785, 8
        %v788 = vpop.permute.xlu0 %787
        %vm790 = vcmask 126016
        %791 = vst.msk [vmem:[#allocation2] sm:$0xf] %vm790, %v788
        %792 = vrot.lane.b32.xlu0 %v722, 112
        %v793 = vpop.permute.xlu0 %792
        %794 = vrot.lane.b32.xlu0 %v727, 112
        %v795 = vpop.permute.xlu0 %794
        %v797 = vsel %vm665, %v793, 0
        %v800 = vsel %vm665, %v795, 0
        %802 = vmatpush.bf16.xpose.msra.mxu0 0
        %803 = vmatpush.bf16.xpose.msra.mxu0 0
        %804 = vmatpush.bf16.xpose.msra.mxu0 0
        %805 = vmatpush.bf16.xpose.msra.mxu0 0
        %806 = vmatpush.bf16.xpose.msra.mxu0 0
        %807 = vmatpush.bf16.xpose.msra.mxu0 0
        %808 = vmatpush.bf16.xpose.msra.mxu0 0
        %809 = vmatpush.bf16.xpose.msra.mxu0 %v800
        %810 = vmatmul.bf16.gmra.mxu0 %v797
        %v811 = vpop.f32.mrf.mxu0
        %v812 = vadd.f32 0.0, %v811
        %v813 = vpop.f32.mrf.mxu0
        %814 = vdwg.mxu0
        %v815 = vsel %vm665, %v812, -inf
        %816 = vmax.xlane.f32.xlu0 %v815
        %v817 = vpop.xlane.xlu0 %816
        %v818 = vsub.f32 %v812, %v817
        %v819 = vmul.f32 %v818, 1.442695
        %v820 = vpow.pop %v819
        %v821 = vsel %vm665, %v820, 0.0
        %822 = vadd.xlane.f32.xlu0 %v821
        %v823 = vpop.xlane.xlu0 %822
        %v824 = vpack.c.bf16 %v820, %v820
        %825 = vrot.lane.b32.xlu0 %v761, 112
        %v826 = vpop.permute.xlu0 %825
        %v828 = vsel %vm665, %v824, 0
        %v831 = vsel %vm698, %v826, 0
        %833 = vmatpush.bf16.msra.mxu0 0
        %834 = vmatpush.bf16.msra.mxu0 0
        %835 = vmatpush.bf16.msra.mxu0 0
        %836 = vmatpush.bf16.msra.mxu0 0
        %837 = vmatpush.bf16.msra.mxu0 0
        %838 = vmatpush.bf16.msra.mxu0 0
        %839 = vmatpush.bf16.msra.mxu0 0
        %840 = vmatpush.bf16.msra.mxu0 %v831
        %841 = vmatmul.bf16.gmra.mxu0 %v828
        %v842 = vpop.f32.mrf.mxu0
        %v843 = vadd.f32 0.0, %v842
        %v844 = vpop.f32.mrf.mxu0
        %845 = vdwg.mxu0
        %v846 = vrcp.pop %v823
        %v847 = vmul.f32 %v843, %v846
        %v848 = vpack.c.bf16 %v847, %v847
        %850 = vrot.lane.b32.xlu0 %v848, 16
        %v851 = vpop.permute.xlu0 %850
        %vm853 = vcmask 191616
        %854 = vst.msk [vmem:[#allocation2] sm:$0xf] %vm853, %v851
        %855 = vrot.lane.b32.xlu0 %v722, 104
        %v856 = vpop.permute.xlu0 %855
        %857 = vrot.lane.b32.xlu0 %v727, 104
        %v858 = vpop.permute.xlu0 %857
        %v860 = vsel %vm665, %v856, 0
        %v863 = vsel %vm665, %v858, 0
        %865 = vmatpush.bf16.xpose.msra.mxu0 0
        %866 = vmatpush.bf16.xpose.msra.mxu0 0
        %867 = vmatpush.bf16.xpose.msra.mxu0 0
        %868 = vmatpush.bf16.xpose.msra.mxu0 0
        %869 = vmatpush.bf16.xpose.msra.mxu0 0
        %870 = vmatpush.bf16.xpose.msra.mxu0 0
        %871 = vmatpush.bf16.xpose.msra.mxu0 0
        %872 = vmatpush.bf16.xpose.msra.mxu0 %v863
        %873 = vmatmul.bf16.gmra.mxu0 %v860
        %v874 = vpop.f32.mrf.mxu0
        %v875 = vadd.f32 0.0, %v874
        %v876 = vpop.f32.mrf.mxu0
        %877 = vdwg.mxu0
        %v878 = vsel %vm665, %v875, -inf
        %879 = vmax.xlane.f32.xlu0 %v878
        %v880 = vpop.xlane.xlu0 %879
        %v881 = vsub.f32 %v875, %v880
        %v882 = vmul.f32 %v881, 1.442695
        %v883 = vpow.pop %v882
        %v884 = vsel %vm665, %v883, 0.0
        %885 = vadd.xlane.f32.xlu0 %v884
        %v886 = vpop.xlane.xlu0 %885
        %v887 = vpack.c.bf16 %v883, %v883
        %888 = vrot.lane.b32.xlu0 %v761, 104
        %v889 = vpop.permute.xlu0 %888
        %v891 = vsel %vm665, %v887, 0
        %v894 = vsel %vm698, %v889, 0
        %896 = vmatpush.bf16.msra.mxu0 0
        %897 = vmatpush.bf16.msra.mxu0 0
        %898 = vmatpush.bf16.msra.mxu0 0
        %899 = vmatpush.bf16.msra.mxu0 0
        %900 = vmatpush.bf16.msra.mxu0 0
        %901 = vmatpush.bf16.msra.mxu0 0
        %902 = vmatpush.bf16.msra.mxu0 0
        %903 = vmatpush.bf16.msra.mxu0 %v894
        %904 = vmatmul.bf16.gmra.mxu0 %v891
        %v905 = vpop.f32.mrf.mxu0
        %v906 = vadd.f32 0.0, %v905
        %v907 = vpop.f32.mrf.mxu0
        %908 = vdwg.mxu0
        %v909 = vrcp.pop %v886
        %v910 = vmul.f32 %v906, %v909
        %v911 = vpack.c.bf16 %v910, %v910
        %913 = vrot.lane.b32.xlu0 %v911, 24
        %v914 = vpop.permute.xlu0 %913
        %vm916 = vcmask 257216
        %917 = vst.msk [vmem:[#allocation2] sm:$0xf] %vm916, %v914
        %v918 = vld [vmem:[#allocation2] sm:$0xf]
        %v919 = vld [vmem:[#allocation14] sm:$0xf]
        %v920 = vld [vmem:[#allocation14 + $0x4] sm:$0xf]
        %v921 = vld [vmem:[#allocation14 + $0x8] sm:$0xf]
        %v922 = vld [vmem:[#allocation14 + $0xc] sm:$0xf]
        %v923 = vld [vmem:[%s10] sm:$0x1]
        %v925 = vperm.slane %v923, 0
        %v931 = vunpack.c.l.b16 %v919
        %v932 = vunpack.c.l.b16 %v920
        %v933 = vunpack.c.l.b16 %v921
        %v934 = vunpack.c.l.b16 %v922
        %v935 = vpack.c.b16 %v932, %v931
        %v936 = vpack.c.b16 %v934, %v933
        %v940 = vsel %vm572, %v918, 0
        %942 = vmatpush.bf16.msra.mxu0 0
        %943 = vmatpush.bf16.msra.mxu0 0
        %944 = vmatpush.bf16.msra.mxu0 0
        %945 = vmatpush.bf16.msra.mxu0 0
        %946 = vmatpush.bf16.msra.mxu0 0
        %947 = vmatpush.bf16.msra.mxu0 0
        %948 = vmatpush.bf16.msra.mxu0 %v936
        %949 = vmatpush.bf16.msra.mxu0 %v935
        %950 = vmatmul.bf16.gmra.mxu0 %v940
        %v951 = vpop.f32.mrf.mxu0
        %v952 = vadd.f32 %v925, %v951
        %v953 = vpop.f32.mrf.mxu0
        %954 = vdwg.mxu0
        %955 = vst.msk [vmem:[%s544] sm:$0xff] %vm572, %v952
        %s956 = sand.u32 %s287, 1
        %s957 = scalar_lea.sflag [#allocation5], %s956
        %s958 = sand.u32 %s287, 1
        %s959 = smul.addr %s958, 8
        %s960 = scalar_lea.vmem [#allocation15], %s959
        // Predicated region
        $region93: #{tpu_custom_call.1} parent=63 // pred_check
          %p961 = pneg %p297
        $region94: #{tpu_custom_call.1} parent=63 // pred_check_branch
          %963 = sbr.rel (%p961) target = $region96
        $region95: #{tpu_custom_call.1} parent=63 // pred_region
          %965 = vsyncadd %s957, 0
          %s966 = smul.addr %s33, 8
          %s967 = scalar_lea.hbm %s11, %s966
          %s969 = sshll.u32 %s960, 4
          %s970 = int_to_ptr.vmem [resolvable:$true] %s969
          %s971 = sshll.u32 %s967, 4
          %s972 = int_to_ptr.hbm [resolvable:$true] %s971
          %974 = dma.vmem_to_hbm [thread:$0]  %s970, 128, %s972, %s957
        $region96: #{tpu_custom_call.1} parent=63 // pred_fallthru
          _
      $region64: #{tpu_custom_call.1} parent=5 // pred_fallthru
        _
      %p975 = scmp.le.s32.totalorder 2, %s28
      // Predicated region
      $region97: #{tpu_custom_call.1} parent=5 // pred_check
        %p976 = pneg %p975
      $region98: #{tpu_custom_call.1} parent=5 // pred_check_branch
        %978 = sbr.rel (%p976) target = $region100
      $region99: #{tpu_custom_call.1} parent=5 // pred_region
        %s979 = ssub.s32 %s28, 2
        // Predicated region
        $region101: #{tpu_custom_call.1} parent=99 // pred_check
          %p980 = pneg %p303
        $region102: #{tpu_custom_call.1} parent=99 // pred_check_branch
          %982 = sbr.rel (%p980) target = $region104
        $region103: #{tpu_custom_call.1} parent=99 // pred_region
          %s983 = sand.u32 %s288, 1
          %s984 = scalar_lea.sflag [#allocation5], %s983
          %s985 = sand.u32 %s288, 1
          %s986 = smul.addr %s985, 8
          %s987 = scalar_lea.vmem [#allocation15], %s986
          %989 = dma.done %s984, 128
        $region104: #{tpu_custom_call.1} parent=99 // pred_fallthru
          _
      $region100: #{tpu_custom_call.1} parent=5 // pred_fallthru
        _
    $region6: #{tpu_custom_call.1} parent=1 // loop_footer
      %s32 = sadd.s32 1, %s28
    $region7: #{tpu_custom_call.1} parent=1 // loop_footer_branch
      %27 = sbr.rel target = $region3
    $region8: #{tpu_custom_call.1} parent=1 // loop_exit
      _
    %990 = vsyncpa [#allocation4], 1
    %s991 = scalar_lea.sflag [#allocation4], 1
    %992 = vsyncpa %s991, 1
    %993 = vsyncpa [#allocation7], 1
    %s994 = scalar_lea.sflag [#allocation7], 1
    %995 = vsyncpa %s994, 1
    %996 = vsyncpa [#allocation10], 1
    %997 = vsyncpa [#allocation13], 1
    %998 = vsyncpa [#allocation5], 1
    %s999 = scalar_lea.sflag [#allocation5], 1
    %1000 = vsyncpa %s999, 1

</llo_original>
